<compile_context>
chip_gen: v5e
topology: v5e:2x2
jax: 0.10.0
libtpu: 0.0.40
codegen_flags: <defaults>
</compile_context>

<pallas_src>
import jax
import jax.numpy as jnp
from jax.experimental import pallas as pl
from jax.experimental.pallas import tpu as pltpu

SMOOTH = 1.0
EPS = 1e-3
GAMMA = 2.0          # exploited as an explicit square below
LANES = 128
MAX_TILE_ROWS = 2048  # 2048*128*4B = 1 MiB per input block (double-buffered)


def _pick_tile_rows(rows: int) -> int:
    """Largest divisor of `rows` that is a multiple of 8 and <= MAX_TILE_ROWS.

    Falls back to the full extent (always legal for a BlockSpec dim)."""
    if rows <= MAX_TILE_ROWS:
        return rows
    best = 0
    for d in range(8, MAX_TILE_ROWS + 1, 8):
        if rows % d == 0:
            best = d
    return best if best > 0 else rows


def _dice_focal_kernel(x_ref, t_ref, dice_ref, focal_ref,
                       acc_inter, acc_union, acc_focal):
    t_idx = pl.program_id(1)
    n_t = pl.num_programs(1)

    x = x_ref[0].astype(jnp.float32)   # (TILE_R, LANES)
    t = t_ref[0].astype(jnp.float32)   # (TILE_R, LANES)

    # ---- elementwise partials (VPU + 2 EUP logs; no jnp.power) ----
    xt = x * t
    sq = x * x + t * t
    xc = jnp.clip(x, EPS, 1.0 - EPS)
    one_m = 1.0 - xc
    focal_el = -(t * (one_m * one_m) * jnp.log(xc)
                 + (1.0 - t) * (xc * xc) * jnp.log(one_m))

    # ---- accumulate full-vreg partials; no XLU in the steady state ----
    @pl.when(t_idx == 0)
    def _():
        acc_inter[...] = xt
        acc_union[...] = sq
        acc_focal[...] = focal_el

    @pl.when(t_idx > 0)
    def _():
        acc_inter[...] += xt
        acc_union[...] += sq
        acc_focal[...] += focal_el

    # ---- per-sample epilogue: collapse once, emit lane-dense partials ----
    @pl.when(t_idx == n_t - 1)
    def _():
        inter = jnp.sum(acc_inter[...])
        union = jnp.sum(acc_union[...])
        fsum = jnp.sum(acc_focal[...])
        dice_b = 1.0 - (2.0 * inter + SMOOTH) / (union + SMOOTH)
        dice_ref[...] = jnp.full(dice_ref.shape, dice_b, jnp.float32)
        focal_ref[...] = jnp.full(focal_ref.shape, fsum, jnp.float32)


def dice_and_focal_loss(x, t):
    """x, t: (B, C, H, W) (or any (B, ...)) float. Returns scalar f32 loss."""
    B = x.shape[0]
    N = 1
    for d in x.shape[1:]:
        N *= d
    if N % LANES != 0:
        raise ValueError("flattened feature size must be a multiple of 128")
    rows = N // LANES
    tile_r = _pick_tile_rows(rows)
    n_t = rows // tile_r

    x3 = x.reshape(B, rows, LANES).astype(jnp.float32)
    t3 = t.reshape(B, rows, LANES).astype(jnp.float32)

    dice_p, focal_p = pl.pallas_call(
        _dice_focal_kernel,
        out_shape=(
            jax.ShapeDtypeStruct((B, 1, LANES), jnp.float32),
            jax.ShapeDtypeStruct((B, 1, LANES), jnp.float32),
        ),
        grid_spec=pltpu.PrefetchScalarGridSpec(
            num_scalar_prefetch=0,
            grid=(B, n_t),
            in_specs=[
                pl.BlockSpec((1, tile_r, LANES), lambda b, k: (b, k, 0)),
                pl.BlockSpec((1, tile_r, LANES), lambda b, k: (b, k, 0)),
            ],
            out_specs=[
                pl.BlockSpec((1, 1, LANES), lambda b, k: (b, 0, 0)),
                pl.BlockSpec((1, 1, LANES), lambda b, k: (b, 0, 0)),
            ],
            scratch_shapes=[
                pltpu.VMEM((tile_r, LANES), jnp.float32),  # intersect
                pltpu.VMEM((tile_r, LANES), jnp.float32),  # x^2 + t^2
                pltpu.VMEM((tile_r, LANES), jnp.float32),  # focal sum
            ],
        ),
        compiler_params=pltpu.CompilerParams(
            dimension_semantics=("parallel", "arbitrary")),
    )(x3, t3)

    dice = jnp.mean(dice_p[:, 0, 0])
    focal = jnp.sum(focal_p[:, 0, 0]) / (B * N)
    return dice + focal


def _reference(x, t):
    # pure-JAX reference mirroring the PyTorch module
    B = x.shape[0]
    xf = x.reshape(B, -1)
    tf = t.reshape(B, -1)
    intersect = jnp.sum(xf * tf, axis=1)
    union = jnp.sum(xf ** 2, axis=1) + jnp.sum(tf ** 2, axis=1)
    dice = jnp.mean(1.0 - (2.0 * intersect + SMOOTH) / (union + SMOOTH))
    xc = jnp.clip(x, EPS, 1.0 - EPS)
    focal = jnp.mean(-(t * (1.0 - xc) ** GAMMA * jnp.log(xc)
                       + (1.0 - t) * xc ** GAMMA * jnp.log(1.0 - xc)))
    return dice + focal


if __name__ == "__main__":
    key = jax.random.PRNGKey(0)
    k1, k2 = jax.random.split(key)
    B, C, H, W = 2, 4, 16, 16
    # predictions are probabilities in (0, 1); targets are binary masks
    x = jax.random.uniform(k1, (B, C, H, W), dtype=jnp.float32,
                           minval=0.01, maxval=0.99)
    t = (jax.random.uniform(k2, (B, C, H, W), dtype=jnp.float32) > 0.5
         ).astype(jnp.float32)

    loss = dice_and_focal_loss(x, t)
    loss = jax.block_until_ready(loss)

    ref = _reference(x, t)
    assert jnp.allclose(loss, ref, rtol=1e-5, atol=1e-5), (loss, ref)
    print("KERNEL_OK")
</pallas_src>

<mosaic_0001>
module attributes {stable_mosaic.version = 11 : i64} {
  func.func @_dice_focal_kernel(%arg0: i32, %arg1: i32, %arg2: memref<1x8x128xf32, #tpu.memory_space<vmem>>, %arg3: memref<1x8x128xf32, #tpu.memory_space<vmem>>, %arg4: memref<1x1x128xf32, #tpu.memory_space<vmem>>, %arg5: memref<1x1x128xf32, #tpu.memory_space<vmem>>, %arg6: memref<8x128xf32, #tpu.memory_space<vmem>>, %arg7: memref<8x128xf32, #tpu.memory_space<vmem>>, %arg8: memref<8x128xf32, #tpu.memory_space<vmem>>) attributes {dimension_semantics = [#tpu.dimension_semantics<parallel>, #tpu.dimension_semantics<arbitrary>], iteration_bounds = array<i64: 2, 1>, scalar_prefetch = 0 : i64, scratch_operands = 3 : i64, tpu.core_type = #tpu.core_type<tc>, window_params = [{transform_indices = @transform_0, window_bounds = array<i64: 1, 8, 128>}, {transform_indices = @transform_1, window_bounds = array<i64: 1, 8, 128>}, {transform_indices = @transform_2, window_bounds = array<i64: 1, 1, 128>}, {transform_indices = @transform_3, window_bounds = array<i64: 1, 1, 128>}]} {
    %c0 = arith.constant 0 : index
    %c0_0 = arith.constant 0 : index
    %c0_1 = arith.constant 0 : index
    %0 = vector.load %arg2[%c0, %c0_0, %c0_1] : memref<1x8x128xf32, #tpu.memory_space<vmem>>, vector<1x8x128xf32>
    %1 = vector.shape_cast %0 : vector<1x8x128xf32> to vector<8x128xf32>
    %c0_2 = arith.constant 0 : index
    %c0_3 = arith.constant 0 : index
    %c0_4 = arith.constant 0 : index
    %2 = vector.load %arg3[%c0_2, %c0_3, %c0_4] : memref<1x8x128xf32, #tpu.memory_space<vmem>>, vector<1x8x128xf32>
    %3 = vector.shape_cast %2 : vector<1x8x128xf32> to vector<8x128xf32>
    %4 = arith.mulf %1, %3 : vector<8x128xf32>
    %5 = arith.mulf %1, %1 : vector<8x128xf32>
    %6 = arith.mulf %3, %3 : vector<8x128xf32>
    %7 = arith.addf %5, %6 : vector<8x128xf32>
    %cst = arith.constant 1.000000e-03 : f32
    %cst_5 = arith.constant 9.990000e-01 : f32
    %8 = vector.broadcast %cst : f32 to vector<8x128xf32>
    %9 = arith.maximumf %8, %1 : vector<8x128xf32>
    %10 = vector.broadcast %cst_5 : f32 to vector<8x128xf32>
    %11 = arith.minimumf %10, %9 : vector<8x128xf32>
    %cst_6 = arith.constant 1.000000e+00 : f32
    %12 = vector.broadcast %cst_6 : f32 to vector<8x128xf32>
    %13 = arith.subf %12, %11 : vector<8x128xf32>
    %14 = arith.mulf %13, %13 : vector<8x128xf32>
    %15 = arith.mulf %3, %14 : vector<8x128xf32>
    %16 = math.log %11 : vector<8x128xf32>
    %17 = arith.mulf %15, %16 : vector<8x128xf32>
    %cst_7 = arith.constant 1.000000e+00 : f32
    %18 = vector.broadcast %cst_7 : f32 to vector<8x128xf32>
    %19 = arith.subf %18, %3 : vector<8x128xf32>
    %20 = arith.mulf %11, %11 : vector<8x128xf32>
    %21 = arith.mulf %19, %20 : vector<8x128xf32>
    %22 = math.log %13 : vector<8x128xf32>
    %23 = arith.mulf %21, %22 : vector<8x128xf32>
    %24 = arith.addf %17, %23 : vector<8x128xf32>
    %cst_8 = arith.constant 0.000000e+00 : f32
    %25 = vector.broadcast %cst_8 : f32 to vector<8x128xf32>
    %26 = arith.subf %25, %24 : vector<8x128xf32>
    %c0_i32 = arith.constant 0 : i32
    %27 = arith.cmpi eq, %arg1, %c0_i32 : i32
    %28 = arith.extui %27 : i1 to i32
    %c0_i32_9 = arith.constant 0 : i32
    %29 = arith.cmpi ne, %28, %c0_i32_9 : i32
    scf.if %29 {
      %c0_14 = arith.constant 0 : index
      %c0_15 = arith.constant 0 : index
      %36 = vector.load %arg6[%c0_14, %c0_15] : memref<8x128xf32, #tpu.memory_space<vmem>>, vector<8x128xf32>
      tpu.vector_store %arg6[%c0_14, %c0_15], %4 {strides = array<i32>} : memref<8x128xf32, #tpu.memory_space<vmem>>, vector<8x128xf32>,
      %c0_16 = arith.constant 0 : index
      %c0_17 = arith.constant 0 : index
      %37 = vector.load %arg7[%c0_16, %c0_17] : memref<8x128xf32, #tpu.memory_space<vmem>>, vector<8x128xf32>
      tpu.vector_store %arg7[%c0_16, %c0_17], %7 {strides = array<i32>} : memref<8x128xf32, #tpu.memory_space<vmem>>, vector<8x128xf32>,
      %c0_18 = arith.constant 0 : index
      %c0_19 = arith.constant 0 : index
      %38 = vector.load %arg8[%c0_18, %c0_19] : memref<8x128xf32, #tpu.memory_space<vmem>>, vector<8x128xf32>
      tpu.vector_store %arg8[%c0_18, %c0_19], %26 {strides = array<i32>} : memref<8x128xf32, #tpu.memory_space<vmem>>, vector<8x128xf32>,
    } else {
    }
    %c0_i32_10 = arith.constant 0 : i32
    %30 = arith.cmpi sgt, %arg1, %c0_i32_10 : i32
    %31 = arith.extui %30 : i1 to i32
    %c0_i32_11 = arith.constant 0 : i32
    %32 = arith.cmpi ne, %31, %c0_i32_11 : i32
    scf.if %32 {
      %c0_14 = arith.constant 0 : index
      %c0_15 = arith.constant 0 : index
      %36 = vector.load %arg6[%c0_14, %c0_15] : memref<8x128xf32, #tpu.memory_space<vmem>>, vector<8x128xf32>
      %37 = arith.addf %36, %4 : vector<8x128xf32>
      %c0_16 = arith.constant 0 : index
      %c0_17 = arith.constant 0 : index
      %38 = vector.load %arg6[%c0_16, %c0_17] : memref<8x128xf32, #tpu.memory_space<vmem>>, vector<8x128xf32>
      tpu.vector_store %arg6[%c0_16, %c0_17], %37 {strides = array<i32>} : memref<8x128xf32, #tpu.memory_space<vmem>>, vector<8x128xf32>,
      %c0_18 = arith.constant 0 : index
      %c0_19 = arith.constant 0 : index
      %39 = vector.load %arg7[%c0_18, %c0_19] : memref<8x128xf32, #tpu.memory_space<vmem>>, vector<8x128xf32>
      %40 = arith.addf %39, %7 : vector<8x128xf32>
      %c0_20 = arith.constant 0 : index
      %c0_21 = arith.constant 0 : index
      %41 = vector.load %arg7[%c0_20, %c0_21] : memref<8x128xf32, #tpu.memory_space<vmem>>, vector<8x128xf32>
      tpu.vector_store %arg7[%c0_20, %c0_21], %40 {strides = array<i32>} : memref<8x128xf32, #tpu.memory_space<vmem>>, vector<8x128xf32>,
      %c0_22 = arith.constant 0 : index
      %c0_23 = arith.constant 0 : index
      %42 = vector.load %arg8[%c0_22, %c0_23] : memref<8x128xf32, #tpu.memory_space<vmem>>, vector<8x128xf32>
      %43 = arith.addf %42, %26 : vector<8x128xf32>
      %c0_24 = arith.constant 0 : index
      %c0_25 = arith.constant 0 : index
      %44 = vector.load %arg8[%c0_24, %c0_25] : memref<8x128xf32, #tpu.memory_space<vmem>>, vector<8x128xf32>
      tpu.vector_store %arg8[%c0_24, %c0_25], %43 {strides = array<i32>} : memref<8x128xf32, #tpu.memory_space<vmem>>, vector<8x128xf32>,
    } else {
    }
    %c0_i32_12 = arith.constant 0 : i32
    %33 = arith.cmpi eq, %arg1, %c0_i32_12 : i32
    %34 = arith.extui %33 : i1 to i32
    %c0_i32_13 = arith.constant 0 : i32
    %35 = arith.cmpi ne, %34, %c0_i32_13 : i32
    scf.if %35 {
      %c0_14 = arith.constant 0 : index
      %c0_15 = arith.constant 0 : index
      %36 = vector.load %arg6[%c0_14, %c0_15] : memref<8x128xf32, #tpu.memory_space<vmem>>, vector<8x128xf32>
      %37 = vector.shape_cast %36 : vector<8x128xf32> to vector<1x8x128xf32>
      %cst_16 = arith.constant dense<0.000000e+00> : vector<1xf32>
      %38 = vector.multi_reduction <add>, %37, %cst_16 [1, 2] : vector<1x8x128xf32> to vector<1xf32>
      %39 = vector.shape_cast %38 : vector<1xf32> to vector<1x1x1xf32>
      %40 = vector.extract %39[0, 0, 0] : f32 from vector<1x1x1xf32>
      %c0_17 = arith.constant 0 : index
      %c0_18 = arith.constant 0 : index
      %41 = vector.load %arg7[%c0_17, %c0_18] : memref<8x128xf32, #tpu.memory_space<vmem>>, vector<8x128xf32>
      %42 = vector.shape_cast %41 : vector<8x128xf32> to vector<1x8x128xf32>
      %cst_19 = arith.constant dense<0.000000e+00> : vector<1xf32>
      %43 = vector.multi_reduction <add>, %42, %cst_19 [1, 2] : vector<1x8x128xf32> to vector<1xf32>
      %44 = vector.shape_cast %43 : vector<1xf32> to vector<1x1x1xf32>
      %45 = vector.extract %44[0, 0, 0] : f32 from vector<1x1x1xf32>
      %c0_20 = arith.constant 0 : index
      %c0_21 = arith.constant 0 : index
      %46 = vector.load %arg8[%c0_20, %c0_21] : memref<8x128xf32, #tpu.memory_space<vmem>>, vector<8x128xf32>
      %47 = vector.shape_cast %46 : vector<8x128xf32> to vector<1x8x128xf32>
      %cst_22 = arith.constant dense<0.000000e+00> : vector<1xf32>
      %48 = vector.multi_reduction <add>, %47, %cst_22 [1, 2] : vector<1x8x128xf32> to vector<1xf32>
      %49 = vector.shape_cast %48 : vector<1xf32> to vector<1x1x1xf32>
      %50 = vector.extract %49[0, 0, 0] : f32 from vector<1x1x1xf32>
      %cst_23 = arith.constant 2.000000e+00 : f32
      %51 = arith.mulf %cst_23, %40 : f32
      %cst_24 = arith.constant 1.000000e+00 : f32
      %52 = arith.addf %51, %cst_24 : f32
      %cst_25 = arith.constant 1.000000e+00 : f32
      %53 = arith.addf %45, %cst_25 : f32
      %54 = arith.divf %52, %53 : f32
      %cst_26 = arith.constant 1.000000e+00 : f32
      %55 = arith.subf %cst_26, %54 : f32
      %56 = vector.broadcast %55 : f32 to vector<1x1x128xf32>
      %c0_27 = arith.constant 0 : index
      %c0_28 = arith.constant 0 : index
      %c0_29 = arith.constant 0 : index
      %57 = vector.load %arg4[%c0_27, %c0_28, %c0_29] : memref<1x1x128xf32, #tpu.memory_space<vmem>>, vector<1x1x128xf32>
      tpu.vector_store %arg4[%c0_27, %c0_28, %c0_29], %56 {strides = array<i32>} : memref<1x1x128xf32, #tpu.memory_space<vmem>>, vector<1x1x128xf32>,
      %58 = vector.broadcast %50 : f32 to vector<1x1x128xf32>
      %c0_30 = arith.constant 0 : index
      %c0_31 = arith.constant 0 : index
      %c0_32 = arith.constant 0 : index
      %59 = vector.load %arg5[%c0_30, %c0_31, %c0_32] : memref<1x1x128xf32, #tpu.memory_space<vmem>>, vector<1x1x128xf32>
      tpu.vector_store %arg5[%c0_30, %c0_31, %c0_32], %58 {strides = array<i32>} : memref<1x1x128xf32, #tpu.memory_space<vmem>>, vector<1x1x128xf32>,
    } else {
    }
    return
  }
  func.func @transform_0(%arg0: i32, %arg1: i32) -> (i32, i32, i32) {
    %c0_i32 = arith.constant 0 : i32
    %c0_i32_0 = arith.constant 0 : i32
    return %arg0, %arg1, %c0_i32 : i32, i32, i32
  }
  func.func @transform_1(%arg0: i32, %arg1: i32) -> (i32, i32, i32) {
    %c0_i32 = arith.constant 0 : i32
    %c0_i32_0 = arith.constant 0 : i32
    return %arg0, %arg1, %c0_i32 : i32, i32, i32
  }
  func.func @transform_2(%arg0: i32, %arg1: i32) -> (i32, i32, i32) {
    %c0_i32 = arith.constant 0 : i32
    %c0_i32_0 = arith.constant 0 : i32
    %c0_i32_1 = arith.constant 0 : i32
    return %arg0, %c0_i32, %c0_i32_0 : i32, i32, i32
  }
  func.func @transform_3(%arg0: i32, %arg1: i32) -> (i32, i32, i32) {
    %c0_i32 = arith.constant 0 : i32
    %c0_i32_0 = arith.constant 0 : i32
    %c0_i32_1 = arith.constant 0 : i32
    return %arg0, %c0_i32, %c0_i32_0 : i32, i32, i32
  }
}

</mosaic_0001>

<llo_original>
// kernel: tpu_custom_call.1
$region0: #{tpu_custom_call.1}
  #allocation0 [shape = 'u32[]', space=smem, size = 0x4, offset = 0x4, fixed_abs, tag = 'smem constant byte address 0x4 - core index']
  #allocation1 [shape = 'u32[72,128]{1,0:T(1,128)}', space=vmem, size = 0x9000, scoped, tag = 'internal scratch']
  #allocation2 [shape = 'f32[8,128]{1,0:T(8,128)}', space=vmem, size = 0x1000, scoped, tag = 'scratch operand']
  #allocation3 [shape = 'f32[8,128]{1,0:T(8,128)}', space=vmem, size = 0x1000, scoped, tag = 'scratch operand']
  #allocation4 [shape = 'f32[8,128]{1,0:T(8,128)}', space=vmem, size = 0x1000, scoped, tag = 'scratch operand']
  %s0 = inlined_call_operand.hbm [shape: f32[2,8,128], index: 0, kind: input, shape index: {}]
  %s1 = inlined_call_operand.hbm [shape: f32[2,8,128], index: 1, kind: input, shape index: {}]
  %s2 = inlined_call_operand.hbm [shape: f32[2,1,128], index: 2, kind: output, shape index: {0}]
  %s3 = inlined_call_operand.hbm [shape: f32[2,1,128], index: 3, kind: output, shape index: {1}]
  %4 = xla_tuple %s2, %s3
  %s5 = sld [smem:[#allocation0]]
  $region69: #{tpu_custom_call.1} parent=0
    _
  %s7 = ssub.s32 1, %s5
  %s8 = scalar_select 0, %s7, %s5
  $region1: #{tpu_custom_call.1} parent=0
    #allocation5 [shape = 'u8[8192]{0}', space=vmem, size = 0x2000, scoped, tag = 'input window, operand 0']
    #allocation6 [shape = 's32[2]{0}', space=sflag, size = 0x8, scoped, tag = 'scoped memory for tpu_custom_call.1']
    #allocation7 [shape = 's32[2]{0}', space=sflag, size = 0x8, scoped, tag = 'scoped memory for tpu_custom_call.1']
    #allocation8 [shape = 'u8[8192]{0}', space=vmem, size = 0x2000, scoped, tag = 'input window, operand 1']
    #allocation9 [shape = 's32[2]{0}', space=sflag, size = 0x8, scoped, tag = 'scoped memory for tpu_custom_call.1']
    #allocation10 [shape = 'u8[1024]{0}', space=vmem, size = 0x400, scoped, tag = 'output window, operand 0']
    #allocation11 [shape = 'u8[1024]{0}', space=vmem, size = 0x400, scoped, tag = 'output window, operand 1']
    #allocation12 [shape = 's32[2]{0}', space=sflag, size = 0x8, scoped, tag = 'scoped memory for tpu_custom_call.1']
    %9 = vsyncpa [#allocation6], 0
    %s10 = scalar_lea.sflag [#allocation6], 1
    %11 = vsyncpa %s10, 0
    %12 = vsyncpa [#allocation9], 0
    %s13 = scalar_lea.sflag [#allocation9], 1
    %14 = vsyncpa %s13, 0
    %15 = vsyncpa [#allocation7], 0
    %s16 = scalar_lea.sflag [#allocation7], 1
    %17 = vsyncpa %s16, 0
    %18 = vsyncpa [#allocation12], 0
    %s19 = scalar_lea.sflag [#allocation12], 1
    %20 = vsyncpa %s19, 0
    loop: start=0, step=1, limit=4
    $region2: #{tpu_custom_call.1} parent=1 // loop_pre_header
      _
    $region3: #{tpu_custom_call.1} parent=1 // loop_header
      %s22 = sphi 0, %s26
      %p23 = scmp.ge.s32.totalorder %s22, 4
      %s29 = sphi 0, %s41
      %s30 = sphi 0, %s37
      %s31 = sphi 0, %s29
      %s32 = sphi 0, %s30
      %s33 = sphi 0, %s31
      %s34 = sphi 0, %s32
      %s46 = sphi 0, %s48
      %s49 = sphi 0, %s46
      %s50 = sphi 0, %s49
      %s66 = sphi 0, %s50
      %s74 = sphi 0, %s76
      %s77 = sphi 0, %s74
      %s78 = sphi 0, %s77
      %s94 = sphi 0, %s78
      %s100 = sphi 0, %s102
      %s103 = sphi 0, %s100
      %s104 = sphi 0, %s103
      %s120 = sphi 0, %s104
      %s126 = sphi 0, %s128
      %s129 = sphi 0, %s126
      %s130 = sphi 0, %s129
      %s146 = sphi 0, %s130
    $region4: #{tpu_custom_call.1} parent=1 // loop_header_branch
      %25 = sbr.rel (%p23) target = $region8
    $region5: #{tpu_custom_call.1} parent=1 // loop_body
      %s27 = ssub.s32 %s22, 1
      %s28 = ssub.s32 %s22, 2
      %s35 = sadd.s32 1, %s30
      %p36 = scmp.ge.s32.totalorder %s35, 1
      %s37 = scalar_select %p36, 0, %s35
      %s38 = sadd.s32 1, %s29
      %s39 = scalar_select %p36, %s38, %s29
      %p40 = scmp.ge.s32.totalorder %s39, 2
      %s41 = scalar_select %p40, 0, %s39
      %s42 = ssub.s32 %s29, %s41
      %s43 = ssub.s32 %s30, %s37
      %s44 = sor.u32 %s42, %s43
      %p45 = scmp.eq.s32.totalorder %s44, 0
      %s47 = sadd.s32 %s46, 1
      %s48 = scalar_select %p45, %s46, %s47
      %p51 = pneg %p45
      %p52 = scmp.eq.s32.totalorder %s22, 1
      %p53 = por %p51, %p52
      %p54 = scmp.ne.s32.totalorder %s46, %s49
      %p55 = scmp.eq.s32.totalorder %s22, 0
      %p56 = por %p54, %p55
      %p57 = scmp.ne.s32.totalorder %s46, %s49
      %p58 = scmp.eq.s32.totalorder %s27, 1
      %p59 = por %p57, %p58
      %p60 = scmp.ne.s32.totalorder %s49, %s50
      %p61 = scmp.eq.s32.totalorder %s27, 0
      %p62 = por %p60, %p61
      %p63 = scmp.ne.s32.totalorder %s49, %s50
      %p64 = scmp.eq.s32.totalorder %s28, 1
      %p65 = por %p63, %p64
      %p67 = scmp.ne.s32.totalorder %s50, %s66
      %p68 = scmp.eq.s32.totalorder %s28, 0
      %p69 = por %p67, %p68
      %s70 = ssub.s32 %s29, %s41
      %s71 = ssub.s32 %s30, %s37
      %s72 = sor.u32 %s70, %s71
      %p73 = scmp.eq.s32.totalorder %s72, 0
      %s75 = sadd.s32 %s74, 1
      %s76 = scalar_select %p73, %s74, %s75
      %p79 = pneg %p73
      %p80 = scmp.eq.s32.totalorder %s22, 1
      %p81 = por %p79, %p80
      %p82 = scmp.ne.s32.totalorder %s74, %s77
      %p83 = scmp.eq.s32.totalorder %s22, 0
      %p84 = por %p82, %p83
      %p85 = scmp.ne.s32.totalorder %s74, %s77
      %p86 = scmp.eq.s32.totalorder %s27, 1
      %p87 = por %p85, %p86
      %p88 = scmp.ne.s32.totalorder %s77, %s78
      %p89 = scmp.eq.s32.totalorder %s27, 0
      %p90 = por %p88, %p89
      %p91 = scmp.ne.s32.totalorder %s77, %s78
      %p92 = scmp.eq.s32.totalorder %s28, 1
      %p93 = por %p91, %p92
      %p95 = scmp.ne.s32.totalorder %s78, %s94
      %p96 = scmp.eq.s32.totalorder %s28, 0
      %p97 = por %p95, %p96
      %s98 = ssub.s32 %s29, %s41
      %p99 = scmp.eq.s32.totalorder %s98, 0
      %s101 = sadd.s32 %s100, 1
      %s102 = scalar_select %p99, %s100, %s101
      %p105 = pneg %p99
      %p106 = scmp.eq.s32.totalorder %s22, 1
      %p107 = por %p105, %p106
      %p108 = scmp.ne.s32.totalorder %s100, %s103
      %p109 = scmp.eq.s32.totalorder %s22, 0
      %p110 = por %p108, %p109
      %p111 = scmp.ne.s32.totalorder %s100, %s103
      %p112 = scmp.eq.s32.totalorder %s27, 1
      %p113 = por %p111, %p112
      %p114 = scmp.ne.s32.totalorder %s103, %s104
      %p115 = scmp.eq.s32.totalorder %s27, 0
      %p116 = por %p114, %p115
      %p117 = scmp.ne.s32.totalorder %s103, %s104
      %p118 = scmp.eq.s32.totalorder %s28, 1
      %p119 = por %p117, %p118
      %p121 = scmp.ne.s32.totalorder %s104, %s120
      %p122 = scmp.eq.s32.totalorder %s28, 0
      %p123 = por %p121, %p122
      %s124 = ssub.s32 %s29, %s41
      %p125 = scmp.eq.s32.totalorder %s124, 0
      %s127 = sadd.s32 %s126, 1
      %s128 = scalar_select %p125, %s126, %s127
      %p131 = pneg %p125
      %p132 = scmp.eq.s32.totalorder %s22, 1
      %p133 = por %p131, %p132
      %p134 = scmp.ne.s32.totalorder %s126, %s129
      %p135 = scmp.eq.s32.totalorder %s22, 0
      %p136 = por %p134, %p135
      %p137 = scmp.ne.s32.totalorder %s126, %s129
      %p138 = scmp.eq.s32.totalorder %s27, 1
      %p139 = por %p137, %p138
      %p140 = scmp.ne.s32.totalorder %s129, %s130
      %p141 = scmp.eq.s32.totalorder %s27, 0
      %p142 = por %p140, %p141
      %p143 = scmp.ne.s32.totalorder %s129, %s130
      %p144 = scmp.eq.s32.totalorder %s28, 1
      %p145 = por %p143, %p144
      %p147 = scmp.ne.s32.totalorder %s130, %s146
      %p148 = scmp.eq.s32.totalorder %s28, 0
      %p149 = por %p147, %p148
      %p150 = scmp.le.s32.totalorder 1, %s22
      %p151 = scmp.lt.s32.totalorder %s22, 3
      %p152 = pnand %p150, %p151
      %p153 = pneg %p152
      // Predicated region
      $region9: #{tpu_custom_call.1} parent=5 // pred_check
        _
      $region10: #{tpu_custom_call.1} parent=5 // pred_check_branch
        %155 = sbr.rel (%p152) target = $region12
      $region11: #{tpu_custom_call.1} parent=5 // pred_region
        %s156 = ssub.s32 %s22, 1
      $region12: #{tpu_custom_call.1} parent=5 // pred_fallthru
        _
      %p157 = scmp.lt.s32.totalorder %s22, 2
      // Predicated region
      $region13: #{tpu_custom_call.1} parent=5 // pred_check
        %p158 = pneg %p157
      $region14: #{tpu_custom_call.1} parent=5 // pred_check_branch
        %160 = sbr.rel (%p158) target = $region16
      $region15: #{tpu_custom_call.1} parent=5 // pred_region
        // Predicated region
        $region17: #{tpu_custom_call.1} parent=15 // pred_check
          %p161 = pneg %p56
        $region18: #{tpu_custom_call.1} parent=15 // pred_check_branch
          %163 = sbr.rel (%p161) target = $region20
        $region19: #{tpu_custom_call.1} parent=15 // pred_region
          %s164 = sand.u32 %s46, 1
          %s165 = scalar_lea.sflag [#allocation6], %s164
          %s166 = sand.u32 %s46, 1
          %s167 = smul.addr %s166, 8
          %s168 = scalar_lea.vmem [#allocation5], %s167
          %170 = vsyncadd %s165, 0
          %s171 = sadd.s32 %s30, %s29
          %s172 = smul.addr %s171, 8
          %s173 = scalar_lea.hbm %s0, %s172
          %s175 = sshll.u32 %s173, 4
          %s176 = int_to_ptr.hbm [resolvable:$true] %s175
          %s177 = sshll.u32 %s168, 4
          %s178 = int_to_ptr.vmem [resolvable:$true] %s177
          %180 = dma.hbm_to_vmem [thread:$0]  %s176, 128, %s178, %s165
        $region20: #{tpu_custom_call.1} parent=15 // pred_fallthru
          _
        // Predicated region
        $region21: #{tpu_custom_call.1} parent=15 // pred_check
          %p181 = pneg %p84
        $region22: #{tpu_custom_call.1} parent=15 // pred_check_branch
          %183 = sbr.rel (%p181) target = $region24
        $region23: #{tpu_custom_call.1} parent=15 // pred_region
          %s184 = sand.u32 %s74, 1
          %s185 = scalar_lea.sflag [#allocation9], %s184
          %s186 = sand.u32 %s74, 1
          %s187 = smul.addr %s186, 8
          %s188 = scalar_lea.vmem [#allocation8], %s187
          %190 = vsyncadd %s185, 0
          %s191 = sadd.s32 %s30, %s29
          %s192 = smul.addr %s191, 8
          %s193 = scalar_lea.hbm %s1, %s192
          %s195 = sshll.u32 %s193, 4
          %s196 = int_to_ptr.hbm [resolvable:$true] %s195
          %s197 = sshll.u32 %s188, 4
          %s198 = int_to_ptr.vmem [resolvable:$true] %s197
          %200 = dma.hbm_to_vmem [thread:$0]  %s196, 128, %s198, %s185
        $region24: #{tpu_custom_call.1} parent=15 // pred_fallthru
          _
      $region16: #{tpu_custom_call.1} parent=5 // pred_fallthru
        _
      %p201 = scmp.le.s32.totalorder 1, %s22
      %p202 = scmp.lt.s32.totalorder %s22, 3
      %p203 = pnand %p201, %p202
      %p204 = pneg %p203
      // Predicated region
      $region25: #{tpu_custom_call.1} parent=5 // pred_check
        _
      $region26: #{tpu_custom_call.1} parent=5 // pred_check_branch
        %206 = sbr.rel (%p203) target = $region28
      $region27: #{tpu_custom_call.1} parent=5 // pred_region
        %s207 = ssub.s32 %s22, 1
        %s208 = sand.u32 %s49, 1
        %s209 = scalar_lea.sflag [#allocation6], %s208
        %s210 = sand.u32 %s49, 1
        %s211 = smul.addr %s210, 8
        %s212 = scalar_lea.vmem [#allocation5], %s211
        // Predicated region
        $region29: #{tpu_custom_call.1} parent=27 // pred_check
          %p213 = pneg %p62
        $region30: #{tpu_custom_call.1} parent=27 // pred_check_branch
          %215 = sbr.rel (%p213) target = $region32
        $region31: #{tpu_custom_call.1} parent=27 // pred_region
          %217 = dma.done %s209, 128
        $region32: #{tpu_custom_call.1} parent=27 // pred_fallthru
          _
        %s218 = sand.u32 %s77, 1
        %s219 = scalar_lea.sflag [#allocation9], %s218
        %s220 = sand.u32 %s77, 1
        %s221 = smul.addr %s220, 8
        %s222 = scalar_lea.vmem [#allocation8], %s221
        // Predicated region
        $region33: #{tpu_custom_call.1} parent=27 // pred_check
          %p223 = pneg %p90
        $region34: #{tpu_custom_call.1} parent=27 // pred_check_branch
          %225 = sbr.rel (%p223) target = $region36
        $region35: #{tpu_custom_call.1} parent=27 // pred_region
          %227 = dma.done %s219, 128
        $region36: #{tpu_custom_call.1} parent=27 // pred_fallthru
          _
        %s228 = sand.u32 %s49, 1
        %s229 = scalar_lea.sflag [#allocation6], %s228
        %s230 = sand.u32 %s49, 1
        %s231 = smul.addr %s230, 8
        %s232 = scalar_lea.vmem [#allocation5], %s231
        %p233 = pneg %p62
        %p234 = pneg %p59
        %s235 = sand.u32 %s77, 1
        %s236 = scalar_lea.sflag [#allocation9], %s235
        %s237 = sand.u32 %s77, 1
        %s238 = smul.addr %s237, 8
        %s239 = scalar_lea.vmem [#allocation8], %s238
        %p240 = pneg %p90
        %p241 = pneg %p87
        %p242 = pneg %p116
        %p243 = pneg %p113
        %s244 = sand.u32 %s103, 1
        %s245 = scalar_lea.sflag [#allocation7], %s244
        %s246 = sand.u32 %s103, 1
        %s247 = scalar_lea.vmem [#allocation10], %s246
        %p248 = pneg %p142
        %p249 = pneg %p139
        %s250 = sand.u32 %s129, 1
        %s251 = scalar_lea.sflag [#allocation12], %s250
        %s252 = sand.u32 %s129, 1
        %s253 = scalar_lea.vmem [#allocation11], %s252
        %v254 = vld [vmem:[%s212] sm:$0xff]
        %v255 = vld [vmem:[%s222] sm:$0xff]
        %v256 = vmul.f32 %v254, %v255
        %v257 = vmul.f32 %v254, %v254
        %v258 = vmul.f32 %v255, %v255
        %v259 = vadd.f32 %v257, %v258
        %v260 = vmax.f32 %v254, 0.001
        %v261 = vmin.f32 %v260, 0.999
        %v262 = vsub.f32 1.0, %v261
        %v263 = vmul.f32 %v262, %v262
        %v264 = vmul.f32 %v255, %v263
        %v265 = vlog2.pop %v261
        %v266 = vmul.f32 %v265, 0.6931472
        %v267 = vmul.f32 %v264, %v266
        %v268 = vsub.f32 1.0, %v255
        %v269 = vmul.f32 %v261, %v261
        %v270 = vmul.f32 %v268, %v269
        %v271 = vlog2.pop %v262
        %v272 = vmul.f32 %v271, 0.6931472
        %v273 = vmul.f32 %v270, %v272
        %v274 = vadd.f32 %v267, %v273
        %v275 = vsub.f32 0.0, %v274
        %p276 = scmp.eq.s32.totalorder %s32, 0
        // Predicated region
        $region37: #{tpu_custom_call.1} parent=27 // pred_check
          %p277 = pneg %p276
        $region38: #{tpu_custom_call.1} parent=27 // pred_check_branch
          %279 = sbr.rel (%p277) target = $region40
        $region39: #{tpu_custom_call.1} parent=27 // pred_region
          %280 = vst [vmem:[#allocation2] sm:$0xff] %v256
          %281 = vst [vmem:[#allocation3] sm:$0xff] %v259
          %282 = vst [vmem:[#allocation4] sm:$0xff] %v275
        $region40: #{tpu_custom_call.1} parent=27 // pred_fallthru
          _
        %p283 = scmp.gt.s32.totalorder %s32, 0
        // Predicated region
        $region41: #{tpu_custom_call.1} parent=27 // pred_check
          %p284 = pneg %p283
        $region42: #{tpu_custom_call.1} parent=27 // pred_check_branch
          %286 = sbr.rel (%p284) target = $region44
        $region43: #{tpu_custom_call.1} parent=27 // pred_region
          %v287 = vld [vmem:[#allocation2] sm:$0xff]
          %v288 = vadd.f32 %v287, %v256
          %289 = vst [vmem:[#allocation2] sm:$0xff] %v288
          %v290 = vld [vmem:[#allocation3] sm:$0xff]
          %v291 = vadd.f32 %v290, %v259
          %292 = vst [vmem:[#allocation3] sm:$0xff] %v291
          %v293 = vld [vmem:[#allocation4] sm:$0xff]
          %v294 = vadd.f32 %v293, %v275
          %295 = vst [vmem:[#allocation4] sm:$0xff] %v294
        $region44: #{tpu_custom_call.1} parent=27 // pred_fallthru
          _
        // Predicated region
        $region45: #{tpu_custom_call.1} parent=27 // pred_check
          %p296 = pneg %p276
        $region46: #{tpu_custom_call.1} parent=27 // pred_check_branch
          %298 = sbr.rel (%p296) target = $region48
        $region47: #{tpu_custom_call.1} parent=27 // pred_region
          %v299 = vld [vmem:[#allocation2] sm:$0xff]
          %300 = vadd.xlane.f32.xlu0 %v299
          %v301 = vpop.xlane.xlu0 %300
          %v302 = vrot.slane %v301, 4
          %v303 = vadd.f32 %v301, %v302
          %v304 = vrot.slane %v303, 2
          %v305 = vadd.f32 %v303, %v304
          %v306 = vrot.slane %v305, 1
          %v307 = vadd.f32 %v305, %v306
          %s308 = vtos %v307
          %v309 = vld [vmem:[#allocation3] sm:$0xff]
          %310 = vadd.xlane.f32.xlu0 %v309
          %v311 = vpop.xlane.xlu0 %310
          %v312 = vrot.slane %v311, 4
          %v313 = vadd.f32 %v311, %v312
          %v314 = vrot.slane %v313, 2
          %v315 = vadd.f32 %v313, %v314
          %v316 = vrot.slane %v315, 1
          %v317 = vadd.f32 %v315, %v316
          %s318 = vtos %v317
          %v319 = vld [vmem:[#allocation4] sm:$0xff]
          %320 = vadd.xlane.f32.xlu0 %v319
          %v321 = vpop.xlane.xlu0 %320
          %v322 = vrot.slane %v321, 4
          %v323 = vadd.f32 %v321, %v322
          %v324 = vrot.slane %v323, 2
          %v325 = vadd.f32 %v323, %v324
          %v326 = vrot.slane %v325, 1
          %v327 = vadd.f32 %v325, %v326
          %s328 = vtos %v327
          %s329 = smul.f32 %s308, 2.0
          %s330 = sadd.f32 %s329, 1.0
          %s331 = sadd.f32 %s318, 1.0
          %v332 = vstv %s331
          %v333 = vrcp.pop %v332
          %v334 = vmul.f32 %v332, %v333
          %v335 = vsub.f32 1.0, %v334
          %v336 = vmul.f32 %v333, %v335
          %v337 = vadd.f32 %v333, %v336
          %vm338 = vweird.f32 %v332
          %vm339 = vweird.f32 %v333
          %vm340 = vmor %vm338, %vm339
          %v341 = vsel %vm340, %v333, %v337
          %v342 = vand.u32 2147483647, %v332
          %vm343 = vcmp.eq.f32.partialorder %v342, 8.507059e+37
          %v344 = vand.u32 %v332, 2147483648
          %v345 = vor.u32 1.1754944e-38, %v344
          %v346 = vsel %vm343, %v345, %v341
          %s347 = vtos %v346
          %s348 = smul.f32 %s330, %s347
          %s349 = ssub.f32 1.0, %s348
          %v350 = vstv %s349
          %351 = vst [vmem:[%s247] sm:$0x1] %v350
          %v352 = vstv %s328
          %353 = vst [vmem:[%s253] sm:$0x1] %v352
        $region48: #{tpu_custom_call.1} parent=27 // pred_fallthru
          _
        %s354 = sand.u32 %s103, 1
        %s355 = scalar_lea.sflag [#allocation7], %s354
        %s356 = sand.u32 %s103, 1
        %s357 = scalar_lea.vmem [#allocation10], %s356
        %s358 = sand.u32 %s129, 1
        %s359 = scalar_lea.sflag [#allocation12], %s358
        %s360 = sand.u32 %s129, 1
        %s361 = scalar_lea.vmem [#allocation11], %s360
        // Predicated region
        $region49: #{tpu_custom_call.1} parent=27 // pred_check
          %p362 = pneg %p113
        $region50: #{tpu_custom_call.1} parent=27 // pred_check_branch
          %364 = sbr.rel (%p362) target = $region52
        $region51: #{tpu_custom_call.1} parent=27 // pred_region
          %366 = vsyncadd %s355, 0
          %s367 = scalar_lea.hbm %s2, %s31
          %s369 = sshll.u32 %s357, 4
          %s370 = int_to_ptr.vmem [resolvable:$true] %s369
          %s371 = sshll.u32 %s367, 4
          %s372 = int_to_ptr.hbm [resolvable:$true] %s371
          %374 = dma.vmem_to_hbm [thread:$0]  %s370, 16, %s372, %s355
        $region52: #{tpu_custom_call.1} parent=27 // pred_fallthru
          _
        // Predicated region
        $region53: #{tpu_custom_call.1} parent=27 // pred_check
          %p375 = pneg %p139
        $region54: #{tpu_custom_call.1} parent=27 // pred_check_branch
          %377 = sbr.rel (%p375) target = $region56
        $region55: #{tpu_custom_call.1} parent=27 // pred_region
          %379 = vsyncadd %s359, 0
          %s380 = scalar_lea.hbm %s3, %s31
          %s382 = sshll.u32 %s361, 4
          %s383 = int_to_ptr.vmem [resolvable:$true] %s382
          %s384 = sshll.u32 %s380, 4
          %s385 = int_to_ptr.hbm [resolvable:$true] %s384
          %387 = dma.vmem_to_hbm [thread:$0]  %s383, 16, %s385, %s359
        $region56: #{tpu_custom_call.1} parent=27 // pred_fallthru
          _
      $region28: #{tpu_custom_call.1} parent=5 // pred_fallthru
        _
      %p388 = scmp.le.s32.totalorder 2, %s22
      // Predicated region
      $region57: #{tpu_custom_call.1} parent=5 // pred_check
        %p389 = pneg %p388
      $region58: #{tpu_custom_call.1} parent=5 // pred_check_branch
        %391 = sbr.rel (%p389) target = $region60
      $region59: #{tpu_custom_call.1} parent=5 // pred_region
        %s392 = ssub.s32 %s22, 2
        // Predicated region
        $region61: #{tpu_custom_call.1} parent=59 // pred_check
          %p393 = pneg %p119
        $region62: #{tpu_custom_call.1} parent=59 // pred_check_branch
          %395 = sbr.rel (%p393) target = $region64
        $region63: #{tpu_custom_call.1} parent=59 // pred_region
          %s396 = sand.u32 %s104, 1
          %s397 = scalar_lea.sflag [#allocation7], %s396
          %s398 = sand.u32 %s104, 1
          %s399 = scalar_lea.vmem [#allocation10], %s398
          %401 = dma.done %s397, 16
        $region64: #{tpu_custom_call.1} parent=59 // pred_fallthru
          _
        // Predicated region
        $region65: #{tpu_custom_call.1} parent=59 // pred_check
          %p402 = pneg %p145
        $region66: #{tpu_custom_call.1} parent=59 // pred_check_branch
          %404 = sbr.rel (%p402) target = $region68
        $region67: #{tpu_custom_call.1} parent=59 // pred_region
          %s405 = sand.u32 %s130, 1
          %s406 = scalar_lea.sflag [#allocation12], %s405
          %s407 = sand.u32 %s130, 1
          %s408 = scalar_lea.vmem [#allocation11], %s407
          %410 = dma.done %s406, 16
        $region68: #{tpu_custom_call.1} parent=59 // pred_fallthru
          _
      $region60: #{tpu_custom_call.1} parent=5 // pred_fallthru
        _
    $region6: #{tpu_custom_call.1} parent=1 // loop_footer
      %s26 = sadd.s32 1, %s22
    $region7: #{tpu_custom_call.1} parent=1 // loop_footer_branch
      %21 = sbr.rel target = $region3
    $region8: #{tpu_custom_call.1} parent=1 // loop_exit
      _
    %411 = vsyncpa [#allocation6], 1
    %s412 = scalar_lea.sflag [#allocation6], 1
    %413 = vsyncpa %s412, 1
    %414 = vsyncpa [#allocation9], 1
    %s415 = scalar_lea.sflag [#allocation9], 1
    %416 = vsyncpa %s415, 1
    %417 = vsyncpa [#allocation7], 1
    %s418 = scalar_lea.sflag [#allocation7], 1
    %419 = vsyncpa %s418, 1
    %420 = vsyncpa [#allocation12], 1
    %s421 = scalar_lea.sflag [#allocation12], 1
    %422 = vsyncpa %s421, 1

</llo_original>
